<compile_context>
chip_gen: v5e
topology: v5e:2x2
jax: 0.10.0
libtpu: 0.0.40
codegen_flags: <defaults>
</compile_context>

<pallas_src>
import functools

import jax
import jax.numpy as jnp
from jax.experimental import pallas as pl
from jax.experimental.pallas import tpu as pltpu


# ------------------------------- helpers ------------------------------------

def _round_up(x, m):
    return ((x + m - 1) // m) * m


def _vmem_limit(bytes_needed):
    # Explicit scoped-VMEM budget: at least the 32 MiB default, never absurd.
    return int(min(max(bytes_needed + (8 << 20), 32 << 20), 100 << 20))


# --------------------- small-C fully fused kernel ---------------------------

def _fused_small_kernel(x_ref, wq_ref, bq_ref, o_ref, *, eps, ratio, c_out):
    """Fused NCHW->LayerNorm->Linear->reverse_window for small channel counts.

    x_ref : (1, C, th, W)           VMEM, NCHW input tile
    wq_ref: (N, C)                  SMEM, folded weight  wq[k, c] = gamma[c]*W[c, k]
    bq_ref: (N,)                    SMEM, folded bias    bq[k]   = (beta @ W)[k]
    o_ref : (1, c_out, th*r, W*r)   VMEM, final NCHW output tile (lane-dense)
    """
    r = ratio
    _, C, th, W = x_ref.shape

    x = x_ref[0].astype(jnp.float32)                       # (C, th, W)
    mu = jnp.mean(x, axis=0)                               # (th, W)
    xc = x - mu
    var = jnp.mean(xc * xc, axis=0)
    inv = jax.lax.rsqrt(var + eps)
    xn = [xc[c] * inv for c in range(C)]                   # C planes, (th, W)

    # 0/1 spread matrices built from 2-D iota: S[s2] puts column w at column
    # w*r+s2, P[s1] puts row h at row h*r+s1.  This performs the
    # reverse_window interleave with plain (tiny) matmuls instead of
    # cross-lane reshapes.
    ci = jax.lax.broadcasted_iota(jnp.int32, (W, W * r), 0)
    cj = jax.lax.broadcasted_iota(jnp.int32, (W, W * r), 1)
    S = [(cj == ci * r + s2).astype(jnp.float32) for s2 in range(r)]
    ri = jax.lax.broadcasted_iota(jnp.int32, (th * r, th), 0)
    rj = jax.lax.broadcasted_iota(jnp.int32, (th * r, th), 1)
    P = [(ri == rj * r + s1).astype(jnp.float32) for s1 in range(r)]

    for co in range(c_out):
        tile = jnp.zeros((th * r, W * r), jnp.float32)
        for s1 in range(r):
            q = jnp.zeros((th, W * r), jnp.float32)
            for s2 in range(r):
                k = (s1 * r + s2) * c_out + co             # N is (s1 s2 c)
                p = xn[0] * wq_ref[k, 0]
                for c in range(1, C):
                    p = p + xn[c] * wq_ref[k, c]
                p = p + bq_ref[k]
                q = q + jnp.dot(p, S[s2], preferred_element_type=jnp.float32)
            tile = tile + jnp.dot(P[s1], q, preferred_element_type=jnp.float32)
        o_ref[0, co, :, :] = tile.astype(o_ref.dtype)


def _patch_expand_small(x, wq, bq, *, ratio, c_out, eps):
    B, C, H, W = x.shape
    r = ratio
    # H-chunk: th == H keeps the trailing block dims equal to the full array
    # dims (always legal); for large H use a multiple-of-8 divisor <= 64.
    th = H
    if H > 64 and H % 8 == 0:
        for t in range(8, 65, 8):
            if H % t == 0:
                th = t
    n_h = H // th

    need = 2 * (C * _round_up(th, 8) * _round_up(W, 128) * 4
                + c_out * _round_up(th * r, 8) * _round_up(W * r, 128) * 4)

    return pl.pallas_call(
        functools.partial(_fused_small_kernel, eps=eps, ratio=r, c_out=c_out),
        grid=(B, n_h),
        in_specs=[
            pl.BlockSpec((1, C, th, W), lambda b, h: (b, 0, h, 0)),
            pl.BlockSpec(memory_space=pltpu.MemorySpace.SMEM),   # wq (N, C)
            pl.BlockSpec(memory_space=pltpu.MemorySpace.SMEM),   # bq (N,)
        ],
        out_specs=pl.BlockSpec((1, c_out, th * r, W * r),
                               lambda b, h: (b, 0, h, 0)),
        out_shape=jax.ShapeDtypeStruct((B, c_out, H * r, W * r), x.dtype),
        compiler_params=pltpu.CompilerParams(
            dimension_semantics=("parallel", "parallel"),
            vmem_limit_bytes=_vmem_limit(need)),
    )(x, wq, bq)


# --------------------- large-C row-tiled MXU kernel --------------------------

def _ln_expand_mxu_kernel(x_ref, w_ref, b_ref, o_ref, *, eps):
    """LayerNorm (affine pre-folded) + bf16 MXU matmul on a (tm, C) row tile."""
    x = x_ref[...].astype(jnp.float32)
    mu = jnp.mean(x, axis=-1, keepdims=True)
    xc = x - mu
    var = jnp.mean(xc * xc, axis=-1, keepdims=True)
    xn = xc * jax.lax.rsqrt(var + eps)
    y = jnp.dot(xn.astype(w_ref.dtype), w_ref[...],
                preferred_element_type=jnp.float32)
    o_ref[...] = (y + b_ref[...]).astype(o_ref.dtype)


def _pick_tm(M, cap):
    """Largest multiple-of-8 divisor of M that is <= cap (0 if none)."""
    cap = max(8, min(cap, M))
    best = 0
    for t in range(8, cap + 1, 8):
        if M % t == 0:
            best = t
    return best


def _ln_expand_rows(xr, w_fold, b_fold, *, eps, block_rows):
    M, C = xr.shape
    N = w_fold.shape[1]
    tm = _pick_tm(M, block_rows)
    pad = 0
    if tm == 0:  # rare fallback: M has no multiple-of-8 divisor <= block_rows
        tm = max(8, min(block_rows, _round_up(M, 8)))
        pad = _round_up(M, tm) - M
        xr = jnp.pad(xr, ((0, pad), (0, 0)))
    m_total = M + pad

    need = (2 * tm * C * 4 + 2 * tm * N * 4
            + C * N * w_fold.dtype.itemsize + N * 4)

    out = pl.pallas_call(
        functools.partial(_ln_expand_mxu_kernel, eps=eps),
        grid=(m_total // tm,),
        in_specs=[
            pl.BlockSpec((tm, C), lambda i: (i, 0)),               # activations
            pl.BlockSpec((C, N), lambda i: (0, 0),
                         pipeline_mode=pl.Buffered(1)),            # bf16 weight
            pl.BlockSpec((1, N), lambda i: (0, 0),
                         pipeline_mode=pl.Buffered(1)),            # folded bias
        ],
        out_specs=pl.BlockSpec((tm, N), lambda i: (i, 0)),
        out_shape=jax.ShapeDtypeStruct((m_total, N), xr.dtype),
        compiler_params=pltpu.CompilerParams(
            dimension_semantics=("parallel",),
            vmem_limit_bytes=_vmem_limit(need)),
    )(xr, w_fold, b_fold)
    return out[:M] if pad else out


# ------------------------------ module wrapper -------------------------------

def patch_expanding(x, gamma, beta, w_expand, *, ratio=2, eps=1e-5,
                    block_rows=512, mxu_dtype=jnp.bfloat16):
    """PatchExpanding.forward.

    x:          (B, C, H, W)  NCHW, C == dim
    gamma/beta: (C,)          LayerNorm affine params
    w_expand:   (C, N)        expand weight, N = factor*ratio*C
                              (== PyTorch nn.Linear.weight.T, bias=False)
    returns:    (B, N // ratio**2, H*ratio, W*ratio)
    """
    B, C, H, W = x.shape
    N = w_expand.shape[1]
    assert N % (ratio * ratio) == 0
    c_out = N // (ratio * ratio)

    # Fold the LayerNorm affine into the expand weight (done once, in XLA):
    #   (xhat*gamma + beta) @ W == xhat @ (gamma[:,None]*W) + beta @ W
    w_fold = (gamma[:, None].astype(jnp.float32) * w_expand.astype(jnp.float32))
    b_fold = jnp.dot(beta.astype(jnp.float32), w_expand.astype(jnp.float32),
                     precision=jax.lax.Precision.HIGHEST)

    if C * N <= 256:
        # Small-channel path (the shipped dim=4 / N=8 config): fully fused,
        # touches each input/output element exactly once, lane-dense output.
        return _patch_expand_small(x, w_fold.T, b_fold,
                                   ratio=ratio, c_out=c_out, eps=eps)

    # Large-channel path: row-tiled LayerNorm + bf16 MXU matmul.
    xr = jnp.transpose(x, (0, 2, 3, 1)).reshape(B * H * W, C)
    y = _ln_expand_rows(xr, w_fold.astype(mxu_dtype),
                        b_fold.reshape(1, N).astype(jnp.float32),
                        eps=eps, block_rows=block_rows)
    # TODO(synk): fold this reverse_window scatter (and the entry transpose)
    # into the kernel's out_spec for the MXU path as done in the small-C path.
    y = y.reshape(B, H, W, ratio, ratio, c_out)
    y = jnp.transpose(y, (0, 5, 1, 3, 2, 4))
    return y.reshape(B, c_out, H * ratio, W * ratio)


# ------------------------------ pure-JAX reference ---------------------------

def _reference(x, gamma, beta, w_expand, ratio, eps=1e-5):
    B, C, H, W = x.shape
    N = w_expand.shape[1]
    c_out = N // (ratio * ratio)
    xr = jnp.transpose(x, (0, 2, 3, 1)).astype(jnp.float32)
    mu = jnp.mean(xr, axis=-1, keepdims=True)
    xc = xr - mu
    var = jnp.mean(xc * xc, axis=-1, keepdims=True)
    xn = xc * jax.lax.rsqrt(var + eps) * gamma + beta
    y = jnp.dot(xn.reshape(-1, C), w_expand.astype(jnp.float32),
                precision=jax.lax.Precision.HIGHEST)
    y = y.reshape(B, H, W, ratio, ratio, c_out)
    return jnp.transpose(y, (0, 5, 1, 3, 2, 4)).reshape(
        B, c_out, H * ratio, W * ratio)


# ----------------------------------- main ------------------------------------

if __name__ == "__main__":
    key = jax.random.PRNGKey(0)
    kx, kg, kb, kw, kx2, kg2, kb2, kw2 = jax.random.split(key, 8)

    # ---- shipped config: dim=4, ratio=2, factor=1  (small-C fused path) ----
    B, C, H, W = 2, 4, 16, 16
    ratio, factor = 2, 1
    N = factor * ratio * C                       # 8

    x = jax.random.normal(kx, (B, C, H, W), jnp.float32)
    gamma = 1.0 + 0.1 * jax.random.normal(kg, (C,), jnp.float32)
    beta = 0.1 * jax.random.normal(kb, (C,), jnp.float32)
    w_expand = 0.05 * jax.random.normal(kw, (C, N), jnp.float32)

    out = patch_expanding(x, gamma, beta, w_expand, ratio=ratio)
    jax.block_until_ready(out)
    assert out.shape == (B, N // (ratio * ratio), H * ratio, W * ratio)
    ref = _reference(x, gamma, beta, w_expand, ratio)
    assert jnp.allclose(out, ref, atol=2e-4, rtol=2e-4), "small-C path mismatch"

    # ---- larger-channel config (bf16 MXU path), still small shapes ----
    B2, C2, H2, W2 = 1, 128, 8, 8
    N2 = factor * ratio * C2                     # 256

    x2 = jax.random.normal(kx2, (B2, C2, H2, W2), jnp.float32)
    gamma2 = 1.0 + 0.1 * jax.random.normal(kg2, (C2,), jnp.float32)
    beta2 = 0.1 * jax.random.normal(kb2, (C2,), jnp.float32)
    w_expand2 = 0.05 * jax.random.normal(kw2, (C2, N2), jnp.float32)

    out2 = patch_expanding(x2, gamma2, beta2, w_expand2, ratio=ratio)
    jax.block_until_ready(out2)
    assert out2.shape == (B2, N2 // (ratio * ratio), H2 * ratio, W2 * ratio)
    ref2 = _reference(x2, gamma2, beta2, w_expand2, ratio)
    assert jnp.allclose(out2, ref2, atol=2e-2, rtol=2e-2), "MXU path mismatch"

    print("KERNEL_OK")
</pallas_src>

<mosaic_0001>
module attributes {stable_mosaic.version = 11 : i64} {
  func.func @_fused_small_kernel(%arg0: i32, %arg1: i32, %arg2: memref<1x4x16x16xf32, #tpu.memory_space<vmem>>, %arg3: memref<8x4xf32, #tpu.memory_space<smem>>, %arg4: memref<8xf32, #tpu.memory_space<smem>>, %arg5: memref<1x2x32x32xf32, #tpu.memory_space<vmem>>) attributes {dimension_semantics = [#tpu.dimension_semantics<parallel>, #tpu.dimension_semantics<parallel>], iteration_bounds = array<i64: 2, 1>, scalar_prefetch = 0 : i64, scratch_operands = 0 : i64, tpu.core_type = #tpu.core_type<tc>, window_params = [{transform_indices = @transform_0, window_bounds = array<i64: 1, 4, 16, 16>}, {transform_indices = @transform_1, window_bounds = array<i64: 8, 4>}, {transform_indices = @transform_2, window_bounds = array<i64: 8>}, {transform_indices = @transform_3, window_bounds = array<i64: 1, 2, 32, 32>}]} {
    %c0 = arith.constant 0 : index
    %c0_0 = arith.constant 0 : index
    %c0_1 = arith.constant 0 : index
    %c0_2 = arith.constant 0 : index
    %0 = vector.load %arg2[%c0, %c0_0, %c0_1, %c0_2] : memref<1x4x16x16xf32, #tpu.memory_space<vmem>>, vector<1x4x16x16xf32>
    %1 = vector.shape_cast %0 : vector<1x4x16x16xf32> to vector<4x16x16xf32>
    %cst = arith.constant dense<0.000000e+00> : vector<16x16xf32>
    %2 = vector.multi_reduction <add>, %1, %cst [0] : vector<4x16x16xf32> to vector<16x16xf32>
    %cst_3 = arith.constant 4.000000e+00 : f32
    %3 = vector.broadcast %cst_3 : f32 to vector<16x16xf32>
    %4 = arith.divf %2, %3 : vector<16x16xf32>
    %5 = vector.shape_cast %4 : vector<16x16xf32> to vector<1x16x16xf32>
    %6 = vector.broadcast %5 : vector<1x16x16xf32> to vector<4x16x16xf32>
    %7 = arith.subf %1, %6 : vector<4x16x16xf32>
    %8 = arith.mulf %7, %7 : vector<4x16x16xf32>
    %cst_4 = arith.constant dense<0.000000e+00> : vector<16x16xf32>
    %9 = vector.multi_reduction <add>, %8, %cst_4 [0] : vector<4x16x16xf32> to vector<16x16xf32>
    %cst_5 = arith.constant 4.000000e+00 : f32
    %10 = vector.broadcast %cst_5 : f32 to vector<16x16xf32>
    %11 = arith.divf %9, %10 : vector<16x16xf32>
    %cst_6 = arith.constant 9.99999974E-6 : f32
    %12 = vector.broadcast %cst_6 : f32 to vector<16x16xf32>
    %13 = arith.addf %11, %12 : vector<16x16xf32>
    %14 = math.rsqrt %13 : vector<16x16xf32>
    %15 = vector.extract_strided_slice %7 {offsets = [0, 0, 0], sizes = [1, 16, 16], strides = [1, 1, 1]} : vector<4x16x16xf32> to vector<1x16x16xf32>
    %16 = vector.shape_cast %15 : vector<1x16x16xf32> to vector<16x16xf32>
    %17 = arith.mulf %16, %14 : vector<16x16xf32>
    %18 = vector.extract_strided_slice %7 {offsets = [1, 0, 0], sizes = [1, 16, 16], strides = [1, 1, 1]} : vector<4x16x16xf32> to vector<1x16x16xf32>
    %19 = vector.shape_cast %18 : vector<1x16x16xf32> to vector<16x16xf32>
    %20 = arith.mulf %19, %14 : vector<16x16xf32>
    %21 = vector.extract_strided_slice %7 {offsets = [2, 0, 0], sizes = [1, 16, 16], strides = [1, 1, 1]} : vector<4x16x16xf32> to vector<1x16x16xf32>
    %22 = vector.shape_cast %21 : vector<1x16x16xf32> to vector<16x16xf32>
    %23 = arith.mulf %22, %14 : vector<16x16xf32>
    %24 = vector.extract_strided_slice %7 {offsets = [3, 0, 0], sizes = [1, 16, 16], strides = [1, 1, 1]} : vector<4x16x16xf32> to vector<1x16x16xf32>
    %25 = vector.shape_cast %24 : vector<1x16x16xf32> to vector<16x16xf32>
    %26 = arith.mulf %25, %14 : vector<16x16xf32>
    %27 = tpu.iota {dimensions = array<i32: 0>} : vector<16x32xi32>
    %28 = tpu.iota {dimensions = array<i32: 1>} : vector<16x32xi32>
    %c2_i32 = arith.constant 2 : i32
    %29 = vector.broadcast %c2_i32 : i32 to vector<16x32xi32>
    %30 = arith.muli %27, %29 : vector<16x32xi32>
    %c0_i32 = arith.constant 0 : i32
    %31 = vector.broadcast %c0_i32 : i32 to vector<16x32xi32>
    %32 = arith.addi %30, %31 : vector<16x32xi32>
    %33 = arith.cmpi eq, %28, %32 : vector<16x32xi32>
    %34 = arith.extui %33 : vector<16x32xi1> to vector<16x32xi32>
    %35 = arith.sitofp %34 : vector<16x32xi32> to vector<16x32xf32>
    %c2_i32_7 = arith.constant 2 : i32
    %36 = vector.broadcast %c2_i32_7 : i32 to vector<16x32xi32>
    %37 = arith.muli %27, %36 : vector<16x32xi32>
    %c1_i32 = arith.constant 1 : i32
    %38 = vector.broadcast %c1_i32 : i32 to vector<16x32xi32>
    %39 = arith.addi %37, %38 : vector<16x32xi32>
    %40 = arith.cmpi eq, %28, %39 : vector<16x32xi32>
    %41 = arith.extui %40 : vector<16x32xi1> to vector<16x32xi32>
    %42 = arith.sitofp %41 : vector<16x32xi32> to vector<16x32xf32>
    %43 = tpu.iota {dimensions = array<i32: 0>} : vector<32x16xi32>
    %44 = tpu.iota {dimensions = array<i32: 1>} : vector<32x16xi32>
    %c2_i32_8 = arith.constant 2 : i32
    %45 = vector.broadcast %c2_i32_8 : i32 to vector<32x16xi32>
    %46 = arith.muli %44, %45 : vector<32x16xi32>
    %c0_i32_9 = arith.constant 0 : i32
    %47 = vector.broadcast %c0_i32_9 : i32 to vector<32x16xi32>
    %48 = arith.addi %46, %47 : vector<32x16xi32>
    %49 = arith.cmpi eq, %43, %48 : vector<32x16xi32>
    %50 = arith.extui %49 : vector<32x16xi1> to vector<32x16xi32>
    %51 = arith.sitofp %50 : vector<32x16xi32> to vector<32x16xf32>
    %c2_i32_10 = arith.constant 2 : i32
    %52 = vector.broadcast %c2_i32_10 : i32 to vector<32x16xi32>
    %53 = arith.muli %44, %52 : vector<32x16xi32>
    %c1_i32_11 = arith.constant 1 : i32
    %54 = vector.broadcast %c1_i32_11 : i32 to vector<32x16xi32>
    %55 = arith.addi %53, %54 : vector<32x16xi32>
    %56 = arith.cmpi eq, %43, %55 : vector<32x16xi32>
    %57 = arith.extui %56 : vector<32x16xi1> to vector<32x16xi32>
    %58 = arith.sitofp %57 : vector<32x16xi32> to vector<32x16xf32>
    %cst_12 = arith.constant 0.000000e+00 : f32
    %59 = vector.broadcast %cst_12 : f32 to vector<32x32xf32>
    %cst_13 = arith.constant 0.000000e+00 : f32
    %60 = vector.broadcast %cst_13 : f32 to vector<16x32xf32>
    %c0_14 = arith.constant 0 : index
    %c0_15 = arith.constant 0 : index
    %61 = memref.load %arg3[%c0_14, %c0_15] : memref<8x4xf32, #tpu.memory_space<smem>>
    %62 = vector.broadcast %61 : f32 to vector<16x16xf32>
    %63 = arith.mulf %17, %62 : vector<16x16xf32>
    %c0_16 = arith.constant 0 : index
    %c1 = arith.constant 1 : index
    %64 = memref.load %arg3[%c0_16, %c1] : memref<8x4xf32, #tpu.memory_space<smem>>
    %65 = vector.broadcast %64 : f32 to vector<16x16xf32>
    %66 = arith.mulf %20, %65 : vector<16x16xf32>
    %67 = arith.addf %63, %66 : vector<16x16xf32>
    %c0_17 = arith.constant 0 : index
    %c2 = arith.constant 2 : index
    %68 = memref.load %arg3[%c0_17, %c2] : memref<8x4xf32, #tpu.memory_space<smem>>
    %69 = vector.broadcast %68 : f32 to vector<16x16xf32>
    %70 = arith.mulf %23, %69 : vector<16x16xf32>
    %71 = arith.addf %67, %70 : vector<16x16xf32>
    %c0_18 = arith.constant 0 : index
    %c3 = arith.constant 3 : index
    %72 = memref.load %arg3[%c0_18, %c3] : memref<8x4xf32, #tpu.memory_space<smem>>
    %73 = vector.broadcast %72 : f32 to vector<16x16xf32>
    %74 = arith.mulf %26, %73 : vector<16x16xf32>
    %75 = arith.addf %71, %74 : vector<16x16xf32>
    %c0_19 = arith.constant 0 : index
    %76 = memref.load %arg4[%c0_19] : memref<8xf32, #tpu.memory_space<smem>>
    %77 = vector.broadcast %76 : f32 to vector<16x16xf32>
    %78 = arith.addf %75, %77 : vector<16x16xf32>
    %cst_20 = arith.constant dense<0.000000e+00> : vector<16x32xf32>
    %79 = tpu.matmul %78, %35, %cst_20 {dimension_numbers = #tpu.dot_dimension_numbers<[1], [0], [0], [1], [0, 0, 1, 1], [], []>} : vector<16x16xf32>, vector<16x32xf32>, vector<16x32xf32> -> vector<16x32xf32>
    %80 = arith.addf %60, %79 : vector<16x32xf32>
    %c2_21 = arith.constant 2 : index
    %c0_22 = arith.constant 0 : index
    %81 = memref.load %arg3[%c2_21, %c0_22] : memref<8x4xf32, #tpu.memory_space<smem>>
    %82 = vector.broadcast %81 : f32 to vector<16x16xf32>
    %83 = arith.mulf %17, %82 : vector<16x16xf32>
    %c2_23 = arith.constant 2 : index
    %c1_24 = arith.constant 1 : index
    %84 = memref.load %arg3[%c2_23, %c1_24] : memref<8x4xf32, #tpu.memory_space<smem>>
    %85 = vector.broadcast %84 : f32 to vector<16x16xf32>
    %86 = arith.mulf %20, %85 : vector<16x16xf32>
    %87 = arith.addf %83, %86 : vector<16x16xf32>
    %c2_25 = arith.constant 2 : index
    %c2_26 = arith.constant 2 : index
    %88 = memref.load %arg3[%c2_25, %c2_26] : memref<8x4xf32, #tpu.memory_space<smem>>
    %89 = vector.broadcast %88 : f32 to vector<16x16xf32>
    %90 = arith.mulf %23, %89 : vector<16x16xf32>
    %91 = arith.addf %87, %90 : vector<16x16xf32>
    %c2_27 = arith.constant 2 : index
    %c3_28 = arith.constant 3 : index
    %92 = memref.load %arg3[%c2_27, %c3_28] : memref<8x4xf32, #tpu.memory_space<smem>>
    %93 = vector.broadcast %92 : f32 to vector<16x16xf32>
    %94 = arith.mulf %26, %93 : vector<16x16xf32>
    %95 = arith.addf %91, %94 : vector<16x16xf32>
    %c2_29 = arith.constant 2 : index
    %96 = memref.load %arg4[%c2_29] : memref<8xf32, #tpu.memory_space<smem>>
    %97 = vector.broadcast %96 : f32 to vector<16x16xf32>
    %98 = arith.addf %95, %97 : vector<16x16xf32>
    %cst_30 = arith.constant dense<0.000000e+00> : vector<16x32xf32>
    %99 = tpu.matmul %98, %42, %cst_30 {dimension_numbers = #tpu.dot_dimension_numbers<[1], [0], [0], [1], [0, 0, 1, 1], [], []>} : vector<16x16xf32>, vector<16x32xf32>, vector<16x32xf32> -> vector<16x32xf32>
    %100 = arith.addf %80, %99 : vector<16x32xf32>
    %cst_31 = arith.constant dense<0.000000e+00> : vector<32x32xf32>
    %101 = tpu.matmul %51, %100, %cst_31 {dimension_numbers = #tpu.dot_dimension_numbers<[1], [0], [0], [1], [0, 0, 1, 1], [], []>} : vector<32x16xf32>, vector<16x32xf32>, vector<32x32xf32> -> vector<32x32xf32>
    %102 = arith.addf %59, %101 : vector<32x32xf32>
    %cst_32 = arith.constant 0.000000e+00 : f32
    %103 = vector.broadcast %cst_32 : f32 to vector<16x32xf32>
    %c4 = arith.constant 4 : index
    %c0_33 = arith.constant 0 : index
    %104 = memref.load %arg3[%c4, %c0_33] : memref<8x4xf32, #tpu.memory_space<smem>>
    %105 = vector.broadcast %104 : f32 to vector<16x16xf32>
    %106 = arith.mulf %17, %105 : vector<16x16xf32>
    %c4_34 = arith.constant 4 : index
    %c1_35 = arith.constant 1 : index
    %107 = memref.load %arg3[%c4_34, %c1_35] : memref<8x4xf32, #tpu.memory_space<smem>>
    %108 = vector.broadcast %107 : f32 to vector<16x16xf32>
    %109 = arith.mulf %20, %108 : vector<16x16xf32>
    %110 = arith.addf %106, %109 : vector<16x16xf32>
    %c4_36 = arith.constant 4 : index
    %c2_37 = arith.constant 2 : index
    %111 = memref.load %arg3[%c4_36, %c2_37] : memref<8x4xf32, #tpu.memory_space<smem>>
    %112 = vector.broadcast %111 : f32 to vector<16x16xf32>
    %113 = arith.mulf %23, %112 : vector<16x16xf32>
    %114 = arith.addf %110, %113 : vector<16x16xf32>
    %c4_38 = arith.constant 4 : index
    %c3_39 = arith.constant 3 : index
    %115 = memref.load %arg3[%c4_38, %c3_39] : memref<8x4xf32, #tpu.memory_space<smem>>
    %116 = vector.broadcast %115 : f32 to vector<16x16xf32>
    %117 = arith.mulf %26, %116 : vector<16x16xf32>
    %118 = arith.addf %114, %117 : vector<16x16xf32>
    %c4_40 = arith.constant 4 : index
    %119 = memref.load %arg4[%c4_40] : memref<8xf32, #tpu.memory_space<smem>>
    %120 = vector.broadcast %119 : f32 to vector<16x16xf32>
    %121 = arith.addf %118, %120 : vector<16x16xf32>
    %cst_41 = arith.constant dense<0.000000e+00> : vector<16x32xf32>
    %122 = tpu.matmul %121, %35, %cst_41 {dimension_numbers = #tpu.dot_dimension_numbers<[1], [0], [0], [1], [0, 0, 1, 1], [], []>} : vector<16x16xf32>, vector<16x32xf32>, vector<16x32xf32> -> vector<16x32xf32>
    %123 = arith.addf %103, %122 : vector<16x32xf32>
    %c6 = arith.constant 6 : index
    %c0_42 = arith.constant 0 : index
    %124 = memref.load %arg3[%c6, %c0_42] : memref<8x4xf32, #tpu.memory_space<smem>>
    %125 = vector.broadcast %124 : f32 to vector<16x16xf32>
    %126 = arith.mulf %17, %125 : vector<16x16xf32>
    %c6_43 = arith.constant 6 : index
    %c1_44 = arith.constant 1 : index
    %127 = memref.load %arg3[%c6_43, %c1_44] : memref<8x4xf32, #tpu.memory_space<smem>>
    %128 = vector.broadcast %127 : f32 to vector<16x16xf32>
    %129 = arith.mulf %20, %128 : vector<16x16xf32>
    %130 = arith.addf %126, %129 : vector<16x16xf32>
    %c6_45 = arith.constant 6 : index
    %c2_46 = arith.constant 2 : index
    %131 = memref.load %arg3[%c6_45, %c2_46] : memref<8x4xf32, #tpu.memory_space<smem>>
    %132 = vector.broadcast %131 : f32 to vector<16x16xf32>
    %133 = arith.mulf %23, %132 : vector<16x16xf32>
    %134 = arith.addf %130, %133 : vector<16x16xf32>
    %c6_47 = arith.constant 6 : index
    %c3_48 = arith.constant 3 : index
    %135 = memref.load %arg3[%c6_47, %c3_48] : memref<8x4xf32, #tpu.memory_space<smem>>
    %136 = vector.broadcast %135 : f32 to vector<16x16xf32>
    %137 = arith.mulf %26, %136 : vector<16x16xf32>
    %138 = arith.addf %134, %137 : vector<16x16xf32>
    %c6_49 = arith.constant 6 : index
    %139 = memref.load %arg4[%c6_49] : memref<8xf32, #tpu.memory_space<smem>>
    %140 = vector.broadcast %139 : f32 to vector<16x16xf32>
    %141 = arith.addf %138, %140 : vector<16x16xf32>
    %cst_50 = arith.constant dense<0.000000e+00> : vector<16x32xf32>
    %142 = tpu.matmul %141, %42, %cst_50 {dimension_numbers = #tpu.dot_dimension_numbers<[1], [0], [0], [1], [0, 0, 1, 1], [], []>} : vector<16x16xf32>, vector<16x32xf32>, vector<16x32xf32> -> vector<16x32xf32>
    %143 = arith.addf %123, %142 : vector<16x32xf32>
    %cst_51 = arith.constant dense<0.000000e+00> : vector<32x32xf32>
    %144 = tpu.matmul %58, %143, %cst_51 {dimension_numbers = #tpu.dot_dimension_numbers<[1], [0], [0], [1], [0, 0, 1, 1], [], []>} : vector<32x16xf32>, vector<16x32xf32>, vector<32x32xf32> -> vector<32x32xf32>
    %145 = arith.addf %102, %144 : vector<32x32xf32>
    %c0_52 = arith.constant 0 : index
    %c0_53 = arith.constant 0 : index
    %c0_54 = arith.constant 0 : index
    %c0_55 = arith.constant 0 : index
    %146 = vector.load %arg5[%c0_52, %c0_53, %c0_54, %c0_55] : memref<1x2x32x32xf32, #tpu.memory_space<vmem>>, vector<1x1x32x32xf32>
    %147 = vector.shape_cast %146 : vector<1x1x32x32xf32> to vector<32x32xf32>
    %148 = vector.shape_cast %145 : vector<32x32xf32> to vector<1x1x32x32xf32>
    tpu.vector_store %arg5[%c0_52, %c0_53, %c0_54, %c0_55], %148 {strides = array<i32>} : memref<1x2x32x32xf32, #tpu.memory_space<vmem>>, vector<1x1x32x32xf32>,
    %cst_56 = arith.constant 0.000000e+00 : f32
    %149 = vector.broadcast %cst_56 : f32 to vector<32x32xf32>
    %cst_57 = arith.constant 0.000000e+00 : f32
    %150 = vector.broadcast %cst_57 : f32 to vector<16x32xf32>
    %c1_58 = arith.constant 1 : index
    %c0_59 = arith.constant 0 : index
    %151 = memref.load %arg3[%c1_58, %c0_59] : memref<8x4xf32, #tpu.memory_space<smem>>
    %152 = vector.broadcast %151 : f32 to vector<16x16xf32>
    %153 = arith.mulf %17, %152 : vector<16x16xf32>
    %c1_60 = arith.constant 1 : index
    %c1_61 = arith.constant 1 : index
    %154 = memref.load %arg3[%c1_60, %c1_61] : memref<8x4xf32, #tpu.memory_space<smem>>
    %155 = vector.broadcast %154 : f32 to vector<16x16xf32>
    %156 = arith.mulf %20, %155 : vector<16x16xf32>
    %157 = arith.addf %153, %156 : vector<16x16xf32>
    %c1_62 = arith.constant 1 : index
    %c2_63 = arith.constant 2 : index
    %158 = memref.load %arg3[%c1_62, %c2_63] : memref<8x4xf32, #tpu.memory_space<smem>>
    %159 = vector.broadcast %158 : f32 to vector<16x16xf32>
    %160 = arith.mulf %23, %159 : vector<16x16xf32>
    %161 = arith.addf %157, %160 : vector<16x16xf32>
    %c1_64 = arith.constant 1 : index
    %c3_65 = arith.constant 3 : index
    %162 = memref.load %arg3[%c1_64, %c3_65] : memref<8x4xf32, #tpu.memory_space<smem>>
    %163 = vector.broadcast %162 : f32 to vector<16x16xf32>
    %164 = arith.mulf %26, %163 : vector<16x16xf32>
    %165 = arith.addf %161, %164 : vector<16x16xf32>
    %c1_66 = arith.constant 1 : index
    %166 = memref.load %arg4[%c1_66] : memref<8xf32, #tpu.memory_space<smem>>
    %167 = vector.broadcast %166 : f32 to vector<16x16xf32>
    %168 = arith.addf %165, %167 : vector<16x16xf32>
    %cst_67 = arith.constant dense<0.000000e+00> : vector<16x32xf32>
    %169 = tpu.matmul %168, %35, %cst_67 {dimension_numbers = #tpu.dot_dimension_numbers<[1], [0], [0], [1], [0, 0, 1, 1], [], []>} : vector<16x16xf32>, vector<16x32xf32>, vector<16x32xf32> -> vector<16x32xf32>
    %170 = arith.addf %150, %169 : vector<16x32xf32>
    %c3_68 = arith.constant 3 : index
    %c0_69 = arith.constant 0 : index
    %171 = memref.load %arg3[%c3_68, %c0_69] : memref<8x4xf32, #tpu.memory_space<smem>>
    %172 = vector.broadcast %171 : f32 to vector<16x16xf32>
    %173 = arith.mulf %17, %172 : vector<16x16xf32>
    %c3_70 = arith.constant 3 : index
    %c1_71 = arith.constant 1 : index
    %174 = memref.load %arg3[%c3_70, %c1_71] : memref<8x4xf32, #tpu.memory_space<smem>>
    %175 = vector.broadcast %174 : f32 to vector<16x16xf32>
    %176 = arith.mulf %20, %175 : vector<16x16xf32>
    %177 = arith.addf %173, %176 : vector<16x16xf32>
    %c3_72 = arith.constant 3 : index
    %c2_73 = arith.constant 2 : index
    %178 = memref.load %arg3[%c3_72, %c2_73] : memref<8x4xf32, #tpu.memory_space<smem>>
    %179 = vector.broadcast %178 : f32 to vector<16x16xf32>
    %180 = arith.mulf %23, %179 : vector<16x16xf32>
    %181 = arith.addf %177, %180 : vector<16x16xf32>
    %c3_74 = arith.constant 3 : index
    %c3_75 = arith.constant 3 : index
    %182 = memref.load %arg3[%c3_74, %c3_75] : memref<8x4xf32, #tpu.memory_space<smem>>
    %183 = vector.broadcast %182 : f32 to vector<16x16xf32>
    %184 = arith.mulf %26, %183 : vector<16x16xf32>
    %185 = arith.addf %181, %184 : vector<16x16xf32>
    %c3_76 = arith.constant 3 : index
    %186 = memref.load %arg4[%c3_76] : memref<8xf32, #tpu.memory_space<smem>>
    %187 = vector.broadcast %186 : f32 to vector<16x16xf32>
    %188 = arith.addf %185, %187 : vector<16x16xf32>
    %cst_77 = arith.constant dense<0.000000e+00> : vector<16x32xf32>
    %189 = tpu.matmul %188, %42, %cst_77 {dimension_numbers = #tpu.dot_dimension_numbers<[1], [0], [0], [1], [0, 0, 1, 1], [], []>} : vector<16x16xf32>, vector<16x32xf32>, vector<16x32xf32> -> vector<16x32xf32>
    %190 = arith.addf %170, %189 : vector<16x32xf32>
    %cst_78 = arith.constant dense<0.000000e+00> : vector<32x32xf32>
    %191 = tpu.matmul %51, %190, %cst_78 {dimension_numbers = #tpu.dot_dimension_numbers<[1], [0], [0], [1], [0, 0, 1, 1], [], []>} : vector<32x16xf32>, vector<16x32xf32>, vector<32x32xf32> -> vector<32x32xf32>
    %192 = arith.addf %149, %191 : vector<32x32xf32>
    %cst_79 = arith.constant 0.000000e+00 : f32
    %193 = vector.broadcast %cst_79 : f32 to vector<16x32xf32>
    %c5 = arith.constant 5 : index
    %c0_80 = arith.constant 0 : index
    %194 = memref.load %arg3[%c5, %c0_80] : memref<8x4xf32, #tpu.memory_space<smem>>
    %195 = vector.broadcast %194 : f32 to vector<16x16xf32>
    %196 = arith.mulf %17, %195 : vector<16x16xf32>
    %c5_81 = arith.constant 5 : index
    %c1_82 = arith.constant 1 : index
    %197 = memref.load %arg3[%c5_81, %c1_82] : memref<8x4xf32, #tpu.memory_space<smem>>
    %198 = vector.broadcast %197 : f32 to vector<16x16xf32>
    %199 = arith.mulf %20, %198 : vector<16x16xf32>
    %200 = arith.addf %196, %199 : vector<16x16xf32>
    %c5_83 = arith.constant 5 : index
    %c2_84 = arith.constant 2 : index
    %201 = memref.load %arg3[%c5_83, %c2_84] : memref<8x4xf32, #tpu.memory_space<smem>>
    %202 = vector.broadcast %201 : f32 to vector<16x16xf32>
    %203 = arith.mulf %23, %202 : vector<16x16xf32>
    %204 = arith.addf %200, %203 : vector<16x16xf32>
    %c5_85 = arith.constant 5 : index
    %c3_86 = arith.constant 3 : index
    %205 = memref.load %arg3[%c5_85, %c3_86] : memref<8x4xf32, #tpu.memory_space<smem>>
    %206 = vector.broadcast %205 : f32 to vector<16x16xf32>
    %207 = arith.mulf %26, %206 : vector<16x16xf32>
    %208 = arith.addf %204, %207 : vector<16x16xf32>
    %c5_87 = arith.constant 5 : index
    %209 = memref.load %arg4[%c5_87] : memref<8xf32, #tpu.memory_space<smem>>
    %210 = vector.broadcast %209 : f32 to vector<16x16xf32>
    %211 = arith.addf %208, %210 : vector<16x16xf32>
    %cst_88 = arith.constant dense<0.000000e+00> : vector<16x32xf32>
    %212 = tpu.matmul %211, %35, %cst_88 {dimension_numbers = #tpu.dot_dimension_numbers<[1], [0], [0], [1], [0, 0, 1, 1], [], []>} : vector<16x16xf32>, vector<16x32xf32>, vector<16x32xf32> -> vector<16x32xf32>
    %213 = arith.addf %193, %212 : vector<16x32xf32>
    %c7 = arith.constant 7 : index
    %c0_89 = arith.constant 0 : index
    %214 = memref.load %arg3[%c7, %c0_89] : memref<8x4xf32, #tpu.memory_space<smem>>
    %215 = vector.broadcast %214 : f32 to vector<16x16xf32>
    %216 = arith.mulf %17, %215 : vector<16x16xf32>
    %c7_90 = arith.constant 7 : index
    %c1_91 = arith.constant 1 : index
    %217 = memref.load %arg3[%c7_90, %c1_91] : memref<8x4xf32, #tpu.memory_space<smem>>
    %218 = vector.broadcast %217 : f32 to vector<16x16xf32>
    %219 = arith.mulf %20, %218 : vector<16x16xf32>
    %220 = arith.addf %216, %219 : vector<16x16xf32>
    %c7_92 = arith.constant 7 : index
    %c2_93 = arith.constant 2 : index
    %221 = memref.load %arg3[%c7_92, %c2_93] : memref<8x4xf32, #tpu.memory_space<smem>>
    %222 = vector.broadcast %221 : f32 to vector<16x16xf32>
    %223 = arith.mulf %23, %222 : vector<16x16xf32>
    %224 = arith.addf %220, %223 : vector<16x16xf32>
    %c7_94 = arith.constant 7 : index
    %c3_95 = arith.constant 3 : index
    %225 = memref.load %arg3[%c7_94, %c3_95] : memref<8x4xf32, #tpu.memory_space<smem>>
    %226 = vector.broadcast %225 : f32 to vector<16x16xf32>
    %227 = arith.mulf %26, %226 : vector<16x16xf32>
    %228 = arith.addf %224, %227 : vector<16x16xf32>
    %c7_96 = arith.constant 7 : index
    %229 = memref.load %arg4[%c7_96] : memref<8xf32, #tpu.memory_space<smem>>
    %230 = vector.broadcast %229 : f32 to vector<16x16xf32>
    %231 = arith.addf %228, %230 : vector<16x16xf32>
    %cst_97 = arith.constant dense<0.000000e+00> : vector<16x32xf32>
    %232 = tpu.matmul %231, %42, %cst_97 {dimension_numbers = #tpu.dot_dimension_numbers<[1], [0], [0], [1], [0, 0, 1, 1], [], []>} : vector<16x16xf32>, vector<16x32xf32>, vector<16x32xf32> -> vector<16x32xf32>
    %233 = arith.addf %213, %232 : vector<16x32xf32>
    %cst_98 = arith.constant dense<0.000000e+00> : vector<32x32xf32>
    %234 = tpu.matmul %58, %233, %cst_98 {dimension_numbers = #tpu.dot_dimension_numbers<[1], [0], [0], [1], [0, 0, 1, 1], [], []>} : vector<32x16xf32>, vector<16x32xf32>, vector<32x32xf32> -> vector<32x32xf32>
    %235 = arith.addf %192, %234 : vector<32x32xf32>
    %c0_99 = arith.constant 0 : index
    %c1_100 = arith.constant 1 : index
    %c0_101 = arith.constant 0 : index
    %c0_102 = arith.constant 0 : index
    %236 = vector.load %arg5[%c0_99, %c1_100, %c0_101, %c0_102] : memref<1x2x32x32xf32, #tpu.memory_space<vmem>>, vector<1x1x32x32xf32>
    %237 = vector.shape_cast %236 : vector<1x1x32x32xf32> to vector<32x32xf32>
    %238 = vector.shape_cast %235 : vector<32x32xf32> to vector<1x1x32x32xf32>
    tpu.vector_store %arg5[%c0_99, %c1_100, %c0_101, %c0_102], %238 {strides = array<i32>} : memref<1x2x32x32xf32, #tpu.memory_space<vmem>>, vector<1x1x32x32xf32>,
    return
  }
  func.func @transform_0(%arg0: i32, %arg1: i32) -> (i32, i32, i32, i32) {
    %c0_i32 = arith.constant 0 : i32
    %c0_i32_0 = arith.constant 0 : i32
    %c0_i32_1 = arith.constant 0 : i32
    return %arg0, %c0_i32, %arg1, %c0_i32_0 : i32, i32, i32, i32
  }
  func.func @transform_1(%arg0: i32, %arg1: i32) -> (i32, i32) {
    %c0_i32 = arith.constant 0 : i32
    %c0_i32_0 = arith.constant 0 : i32
    %c0_i32_1 = arith.constant 0 : i32
    return %c0_i32, %c0_i32_0 : i32, i32
  }
  func.func @transform_2(%arg0: i32, %arg1: i32) -> i32 {
    %c0_i32 = arith.constant 0 : i32
    %c0_i32_0 = arith.constant 0 : i32
    return %c0_i32 : i32
  }
  func.func @transform_3(%arg0: i32, %arg1: i32) -> (i32, i32, i32, i32) {
    %c0_i32 = arith.constant 0 : i32
    %c0_i32_0 = arith.constant 0 : i32
    %c0_i32_1 = arith.constant 0 : i32
    return %arg0, %c0_i32, %arg1, %c0_i32_0 : i32, i32, i32, i32
  }
}

</mosaic_0001>

<llo_original>
// kernel: tpu_custom_call.1
$region0: #{tpu_custom_call.1}
  #allocation0 [shape = 'u32[]', space=smem, size = 0x4, offset = 0x4, fixed_abs, tag = 'smem constant byte address 0x4 - core index']
  #allocation1 [shape = 'u32[72,128]{1,0:T(1,128)}', space=vmem, size = 0x9000, scoped, tag = 'internal scratch']
  %s0 = inlined_call_operand.hbm [shape: f32[2,4,16,16], index: 0, kind: input, shape index: {}]
  %s1 = inlined_call_operand.vmem [shape: f32[8,4], index: 1, kind: input, shape index: {}]
  %s2 = inlined_call_operand.vmem [shape: f32[8], index: 2, kind: input, shape index: {}]
  %s3 = inlined_call_operand.hbm [shape: f32[2,2,32,32], index: 3, kind: output, shape index: {}]
  %s4 = sld [smem:[#allocation0]]
  $region57: #{tpu_custom_call.1} parent=0
    _
  %s6 = ssub.s32 1, %s4
  %s7 = scalar_select 0, %s6, %s4
  $region1: #{tpu_custom_call.1} parent=0
    #allocation2 [shape = 'u8[65536]{0}', space=vmem, size = 0x10000, scoped, tag = 'input window, operand 0']
    #allocation3 [shape = 's32[2]{0}', space=sflag, size = 0x8, scoped, tag = 'scoped memory for tpu_custom_call.1']
    #allocation4 [shape = 's32[2]{0}', space=sflag, size = 0x8, scoped, tag = 'scoped memory for tpu_custom_call.1']
    #allocation5 [shape = 's32[2]{0}', space=sflag, size = 0x8, scoped, tag = 'scoped memory for tpu_custom_call.1']
    #allocation6 [shape = 'u8[4096]{0}', space=smem, size = 0x1000, scoped, tag = 'input window, operand 1, single buffered']
    #allocation7 [shape = 'u8[512]{0}', space=smem, size = 0x200, scoped, tag = 'input window, operand 2, single buffered']
    #allocation8 [shape = 's32[1]{0}', space=sflag, size = 0x4, scoped, tag = 'scoped memory for tpu_custom_call.1']
    #allocation9 [shape = 'u8[65536]{0}', space=vmem, size = 0x10000, scoped, tag = 'output window, operand 0']
    %8 = vsyncpa [#allocation3], 0
    %s9 = scalar_lea.sflag [#allocation3], 1
    %10 = vsyncpa %s9, 0
    %11 = vsyncpa [#allocation5], 0
    %12 = vsyncpa [#allocation8], 0
    %13 = vsyncpa [#allocation4], 0
    %s14 = scalar_lea.sflag [#allocation4], 1
    %15 = vsyncpa %s14, 0
    loop: start=0, step=1, limit=4
    $region2: #{tpu_custom_call.1} parent=1 // loop_pre_header
      _
    $region3: #{tpu_custom_call.1} parent=1 // loop_header
      %s17 = sphi 0, %s21
      %p18 = scmp.ge.s32.totalorder %s17, 4
      %s24 = sphi 0, %s36
      %s25 = sphi 0, %s32
      %s26 = sphi 0, %s24
      %s27 = sphi 0, %s25
      %s28 = sphi 0, %s26
      %s29 = sphi 0, %s27
      %s41 = sphi 0, %s43
      %s44 = sphi 0, %s41
      %s45 = sphi 0, %s44
      %s61 = sphi 0, %s45
      %s65 = sphi 0, %s65
      %s67 = sphi 0, %s65
      %s68 = sphi 0, %s67
      %s82 = sphi 0, %s68
      %s86 = sphi 0, %s86
      %s88 = sphi 0, %s86
      %s89 = sphi 0, %s88
      %s103 = sphi 0, %s89
      %s111 = sphi 0, %s113
      %s114 = sphi 0, %s111
      %s115 = sphi 0, %s114
      %s131 = sphi 0, %s115
    $region4: #{tpu_custom_call.1} parent=1 // loop_header_branch
      %20 = sbr.rel (%p18) target = $region8
    $region5: #{tpu_custom_call.1} parent=1 // loop_body
      %s22 = ssub.s32 %s17, 1
      %s23 = ssub.s32 %s17, 2
      %s30 = sadd.s32 1, %s25
      %p31 = scmp.ge.s32.totalorder %s30, 1
      %s32 = scalar_select %p31, 0, %s30
      %s33 = sadd.s32 1, %s24
      %s34 = scalar_select %p31, %s33, %s24
      %p35 = scmp.ge.s32.totalorder %s34, 2
      %s36 = scalar_select %p35, 0, %s34
      %s37 = ssub.s32 %s24, %s36
      %s38 = ssub.s32 %s25, %s32
      %s39 = sor.u32 %s37, %s38
      %p40 = scmp.eq.s32.totalorder %s39, 0
      %s42 = sadd.s32 %s41, 1
      %s43 = scalar_select %p40, %s41, %s42
      %p46 = pneg %p40
      %p47 = scmp.eq.s32.totalorder %s17, 1
      %p48 = por %p46, %p47
      %p49 = scmp.ne.s32.totalorder %s41, %s44
      %p50 = scmp.eq.s32.totalorder %s17, 0
      %p51 = por %p49, %p50
      %p52 = scmp.ne.s32.totalorder %s41, %s44
      %p53 = scmp.eq.s32.totalorder %s22, 1
      %p54 = por %p52, %p53
      %p55 = scmp.ne.s32.totalorder %s44, %s45
      %p56 = scmp.eq.s32.totalorder %s22, 0
      %p57 = por %p55, %p56
      %p58 = scmp.ne.s32.totalorder %s44, %s45
      %p59 = scmp.eq.s32.totalorder %s23, 1
      %p60 = por %p58, %p59
      %p62 = scmp.ne.s32.totalorder %s45, %s61
      %p63 = scmp.eq.s32.totalorder %s23, 0
      %p64 = por %p62, %p63
      %s66 = sadd.s32 %s65, 1
      %p69 = scmp.eq.s32.totalorder %s17, 1
      %p70 = scmp.ne.s32.totalorder %s65, %s67
      %p71 = scmp.eq.s32.totalorder %s17, 0
      %p72 = por %p70, %p71
      %p73 = scmp.ne.s32.totalorder %s65, %s67
      %p74 = scmp.eq.s32.totalorder %s22, 1
      %p75 = por %p73, %p74
      %p76 = scmp.ne.s32.totalorder %s67, %s68
      %p77 = scmp.eq.s32.totalorder %s22, 0
      %p78 = por %p76, %p77
      %p79 = scmp.ne.s32.totalorder %s67, %s68
      %p80 = scmp.eq.s32.totalorder %s23, 1
      %p81 = por %p79, %p80
      %p83 = scmp.ne.s32.totalorder %s68, %s82
      %p84 = scmp.eq.s32.totalorder %s23, 0
      %p85 = por %p83, %p84
      %s87 = sadd.s32 %s86, 1
      %p90 = scmp.eq.s32.totalorder %s17, 1
      %p91 = scmp.ne.s32.totalorder %s86, %s88
      %p92 = scmp.eq.s32.totalorder %s17, 0
      %p93 = por %p91, %p92
      %p94 = scmp.ne.s32.totalorder %s86, %s88
      %p95 = scmp.eq.s32.totalorder %s22, 1
      %p96 = por %p94, %p95
      %p97 = scmp.ne.s32.totalorder %s88, %s89
      %p98 = scmp.eq.s32.totalorder %s22, 0
      %p99 = por %p97, %p98
      %p100 = scmp.ne.s32.totalorder %s88, %s89
      %p101 = scmp.eq.s32.totalorder %s23, 1
      %p102 = por %p100, %p101
      %p104 = scmp.ne.s32.totalorder %s89, %s103
      %p105 = scmp.eq.s32.totalorder %s23, 0
      %p106 = por %p104, %p105
      %s107 = ssub.s32 %s24, %s36
      %s108 = ssub.s32 %s25, %s32
      %s109 = sor.u32 %s107, %s108
      %p110 = scmp.eq.s32.totalorder %s109, 0
      %s112 = sadd.s32 %s111, 1
      %s113 = scalar_select %p110, %s111, %s112
      %p116 = pneg %p110
      %p117 = scmp.eq.s32.totalorder %s17, 1
      %p118 = por %p116, %p117
      %p119 = scmp.ne.s32.totalorder %s111, %s114
      %p120 = scmp.eq.s32.totalorder %s17, 0
      %p121 = por %p119, %p120
      %p122 = scmp.ne.s32.totalorder %s111, %s114
      %p123 = scmp.eq.s32.totalorder %s22, 1
      %p124 = por %p122, %p123
      %p125 = scmp.ne.s32.totalorder %s114, %s115
      %p126 = scmp.eq.s32.totalorder %s22, 0
      %p127 = por %p125, %p126
      %p128 = scmp.ne.s32.totalorder %s114, %s115
      %p129 = scmp.eq.s32.totalorder %s23, 1
      %p130 = por %p128, %p129
      %p132 = scmp.ne.s32.totalorder %s115, %s131
      %p133 = scmp.eq.s32.totalorder %s23, 0
      %p134 = por %p132, %p133
      %p135 = scmp.le.s32.totalorder 1, %s17
      %p136 = scmp.lt.s32.totalorder %s17, 3
      %p137 = pnand %p135, %p136
      %p138 = pneg %p137
      // Predicated region
      $region9: #{tpu_custom_call.1} parent=5 // pred_check
        _
      $region10: #{tpu_custom_call.1} parent=5 // pred_check_branch
        %140 = sbr.rel (%p137) target = $region12
      $region11: #{tpu_custom_call.1} parent=5 // pred_region
        %s141 = ssub.s32 %s17, 1
        // Predicated region
        $region13: #{tpu_custom_call.1} parent=11 // pred_check
          %p142 = pneg %p78
        $region14: #{tpu_custom_call.1} parent=11 // pred_check_branch
          %144 = sbr.rel (%p142) target = $region16
        $region15: #{tpu_custom_call.1} parent=11 // pred_region
          %146 = vsyncadd [#allocation5], 0
          %s148 = sshll.u32 %s1, 4
          %s149 = int_to_ptr.vmem [resolvable:$true] %s148
          %151 = dma.vmem_to_smem %s149, 128, [#allocation6], [#allocation5]
        $region16: #{tpu_custom_call.1} parent=11 // pred_fallthru
          _
        // Predicated region
        $region17: #{tpu_custom_call.1} parent=11 // pred_check
          %p152 = pneg %p99
        $region18: #{tpu_custom_call.1} parent=11 // pred_check_branch
          %154 = sbr.rel (%p152) target = $region20
        $region19: #{tpu_custom_call.1} parent=11 // pred_region
          %156 = vsyncadd [#allocation8], 0
          %s158 = sshll.u32 %s2, 4
          %s159 = int_to_ptr.vmem [resolvable:$true] %s158
          %161 = dma.vmem_to_smem %s159, 16, [#allocation7], [#allocation8]
        $region20: #{tpu_custom_call.1} parent=11 // pred_fallthru
          _
      $region12: #{tpu_custom_call.1} parent=5 // pred_fallthru
        _
      %p162 = scmp.lt.s32.totalorder %s17, 2
      // Predicated region
      $region21: #{tpu_custom_call.1} parent=5 // pred_check
        %p163 = pneg %p162
      $region22: #{tpu_custom_call.1} parent=5 // pred_check_branch
        %165 = sbr.rel (%p163) target = $region24
      $region23: #{tpu_custom_call.1} parent=5 // pred_region
        // Predicated region
        $region25: #{tpu_custom_call.1} parent=23 // pred_check
          %p166 = pneg %p51
        $region26: #{tpu_custom_call.1} parent=23 // pred_check_branch
          %168 = sbr.rel (%p166) target = $region28
        $region27: #{tpu_custom_call.1} parent=23 // pred_region
          %s169 = sand.u32 %s41, 1
          %s170 = scalar_lea.sflag [#allocation3], %s169
          %s171 = sand.u32 %s41, 1
          %s172 = smul.addr %s171, 64
          %s173 = scalar_lea.vmem [#allocation2], %s172
          %s174 = smul.u32 2, %s25
          %176 = vsyncadd %s170, 0
          %s177 = smul.addr %s24, 8
          %s178 = sadd.s32 %s174, %s177
          %s179 = smul.addr %s178, 8
          %s180 = scalar_lea.hbm %s0, %s179
          %s181 = sshll.u32 %s180, 4
          %s182 = int_to_ptr.hbm [resolvable:$true] %s181
          %s183 = sshll.u32 %s173, 4
          %s184 = int_to_ptr.vmem [resolvable:$true] %s183
          %189 = dma.hbm_to_vmem [thread:$0]  %s182, 1024, %s184, %s170, 128, 128, 8
        $region28: #{tpu_custom_call.1} parent=23 // pred_fallthru
          _
      $region24: #{tpu_custom_call.1} parent=5 // pred_fallthru
        _
      %p190 = scmp.le.s32.totalorder 1, %s17
      %p191 = scmp.lt.s32.totalorder %s17, 3
      %p192 = pnand %p190, %p191
      %p193 = pneg %p192
      // Predicated region
      $region29: #{tpu_custom_call.1} parent=5 // pred_check
        _
      $region30: #{tpu_custom_call.1} parent=5 // pred_check_branch
        %195 = sbr.rel (%p192) target = $region32
      $region31: #{tpu_custom_call.1} parent=5 // pred_region
        %s196 = ssub.s32 %s17, 1
        %s197 = sand.u32 %s44, 1
        %s198 = scalar_lea.sflag [#allocation3], %s197
        %s199 = sand.u32 %s44, 1
        %s200 = smul.addr %s199, 64
        %s201 = scalar_lea.vmem [#allocation2], %s200
        // Predicated region
        $region33: #{tpu_custom_call.1} parent=31 // pred_check
          %p202 = pneg %p57
        $region34: #{tpu_custom_call.1} parent=31 // pred_check_branch
          %204 = sbr.rel (%p202) target = $region36
        $region35: #{tpu_custom_call.1} parent=31 // pred_region
          %206 = dma.done %s198, 1024
        $region36: #{tpu_custom_call.1} parent=31 // pred_fallthru
          _
        // Predicated region
        $region37: #{tpu_custom_call.1} parent=31 // pred_check
          %p207 = pneg %p78
        $region38: #{tpu_custom_call.1} parent=31 // pred_check_branch
          %209 = sbr.rel (%p207) target = $region40
        $region39: #{tpu_custom_call.1} parent=31 // pred_region
          %211 = dma.done [#allocation5], 128
        $region40: #{tpu_custom_call.1} parent=31 // pred_fallthru
          _
        // Predicated region
        $region41: #{tpu_custom_call.1} parent=31 // pred_check
          %p212 = pneg %p99
        $region42: #{tpu_custom_call.1} parent=31 // pred_check_branch
          %214 = sbr.rel (%p212) target = $region44
        $region43: #{tpu_custom_call.1} parent=31 // pred_region
          %216 = dma.done [#allocation8], 16
        $region44: #{tpu_custom_call.1} parent=31 // pred_fallthru
          _
        %217 = sfence
        %s218 = sand.u32 %s44, 1
        %s219 = scalar_lea.sflag [#allocation3], %s218
        %s220 = sand.u32 %s44, 1
        %s221 = smul.addr %s220, 64
        %s222 = scalar_lea.vmem [#allocation2], %s221
        %p223 = pneg %p57
        %p224 = pneg %p54
        %p225 = pneg %p78
        %p226 = pneg %p75
        %p227 = pneg %p99
        %p228 = pneg %p96
        %p229 = pneg %p127
        %p230 = pneg %p124
        %s231 = sand.u32 %s114, 1
        %s232 = scalar_lea.sflag [#allocation4], %s231
        %s233 = sand.u32 %s114, 1
        %s234 = smul.addr %s233, 64
        %s235 = scalar_lea.vmem [#allocation9], %s234
        %s236 = smul.u32 2, %s27
        %s237 = smul.u32 4, %s27
        %v238 = vld [vmem:[%s201] sm:$0xff]
        %v239 = vld [vmem:[%s201 + $0x8] sm:$0xff]
        %v240 = vld [vmem:[%s201 + $0x10] sm:$0xff]
        %v241 = vld [vmem:[%s201 + $0x18] sm:$0xff]
        %v242 = vld [vmem:[%s201 + $0x20] sm:$0xff]
        %v243 = vld [vmem:[%s201 + $0x28] sm:$0xff]
        %v244 = vld [vmem:[%s201 + $0x30] sm:$0xff]
        %v245 = vld [vmem:[%s201 + $0x38] sm:$0xff]
        %vm246 = vcmask 130048
        %v247 = vsel %vm246, %v238, 0.0
        %v248 = vsel %vm246, %v240, 0.0
        %v249 = vadd.f32 %v247, %v248
        %v250 = vsel %vm246, %v242, 0.0
        %v251 = vadd.f32 %v249, %v250
        %v252 = vsel %vm246, %v244, 0.0
        %v253 = vadd.f32 %v251, %v252
        %v254 = vsel %vm246, %v239, 0.0
        %v255 = vsel %vm246, %v241, 0.0
        %v256 = vadd.f32 %v254, %v255
        %v257 = vsel %vm246, %v243, 0.0
        %v258 = vadd.f32 %v256, %v257
        %v259 = vsel %vm246, %v245, 0.0
        %v260 = vadd.f32 %v258, %v259
        %v261 = vrcp.pop 4.0
        %v262 = vmul.f32 4.0, %v261
        %v263 = vsub.f32 1.0, %v262
        %v264 = vmul.f32 %v261, %v263
        %v265 = vadd.f32 %v261, %v264
        %vm266 = vweird.f32 %v261
        %v267 = vsel %vm266, %v261, %v265
        %v268 = vmul.f32 %v253, %v267
        %v269 = vmul.f32 %v260, %v267
        %v270 = vsub.f32 %v238, %v268
        %v271 = vsub.f32 %v239, %v269
        %v272 = vsub.f32 %v240, %v268
        %v273 = vsub.f32 %v241, %v269
        %v274 = vsub.f32 %v242, %v268
        %v275 = vsub.f32 %v243, %v269
        %v276 = vsub.f32 %v244, %v268
        %v277 = vsub.f32 %v245, %v269
        %v278 = vmul.f32 %v270, %v270
        %v279 = vmul.f32 %v271, %v271
        %v280 = vmul.f32 %v272, %v272
        %v281 = vmul.f32 %v273, %v273
        %v282 = vmul.f32 %v274, %v274
        %v283 = vmul.f32 %v275, %v275
        %v284 = vmul.f32 %v276, %v276
        %v285 = vmul.f32 %v277, %v277
        %v286 = vsel %vm246, %v278, 0.0
        %v287 = vsel %vm246, %v280, 0.0
        %v288 = vadd.f32 %v286, %v287
        %v289 = vsel %vm246, %v282, 0.0
        %v290 = vadd.f32 %v288, %v289
        %v291 = vsel %vm246, %v284, 0.0
        %v292 = vadd.f32 %v290, %v291
        %v293 = vsel %vm246, %v279, 0.0
        %v294 = vsel %vm246, %v281, 0.0
        %v295 = vadd.f32 %v293, %v294
        %v296 = vsel %vm246, %v283, 0.0
        %v297 = vadd.f32 %v295, %v296
        %v298 = vsel %vm246, %v285, 0.0
        %v299 = vadd.f32 %v297, %v298
        %v300 = vmul.f32 %v292, %v267
        %v301 = vmul.f32 %v299, %v267
        %v302 = vadd.f32 %v300, 1e-05
        %v303 = vadd.f32 %v301, 1e-05
        %v304 = vrsqrt.pop %v302
        %v305 = vmul.f32 %v304, %v302
        %v306 = vmul.f32 %v305, %v304
        %v307 = vmul.f32 0.5, %v306
        %v308 = vsub.f32 1.5, %v307
        %v309 = vmul.f32 %v304, %v308
        %vm310 = vweird.f32 %v302
        %vm311 = vweird.f32 %v304
        %vm312 = vmor %vm310, %vm311
        %v313 = vsel %vm312, %v304, %v309
        %v314 = vrsqrt.pop %v303
        %v315 = vmul.f32 %v314, %v303
        %v316 = vmul.f32 %v315, %v314
        %v317 = vmul.f32 0.5, %v316
        %v318 = vsub.f32 1.5, %v317
        %v319 = vmul.f32 %v314, %v318
        %vm320 = vweird.f32 %v303
        %vm321 = vweird.f32 %v314
        %vm322 = vmor %vm320, %vm321
        %v323 = vsel %vm322, %v314, %v319
        %v324 = vmul.f32 %v270, %v313
        %v325 = vmul.f32 %v271, %v323
        %v326 = vmul.f32 %v272, %v313
        %v327 = vmul.f32 %v273, %v323
        %v328 = vmul.f32 %v274, %v313
        %v329 = vmul.f32 %v275, %v323
        %v330 = vmul.f32 %v276, %v313
        %v331 = vmul.f32 %v277, %v323
        %v332 = vlaneseq
        %v333 = vshrl.u32 %v332, 7
        %v334 = vadd.s32 %v333, 8
        %v335 = vlaneseq
        %v336 = vand.u32 %v335, 127
        %v337 = vmul.u32 %v333, 2
        %v338 = vmul.u32 %v334, 2
        %vm339 = vcmp.eq.s32.totalorder %v336, %v337
        %vm340 = vcmp.eq.s32.totalorder %v336, %v338
        %v341 = vsel %vm339, 1, 0
        %v342 = vsel %vm340, 1, 0
        %v343 = vcvt.s32.f32 %v341
        %v344 = vcvt.s32.f32 %v342
        %v345 = vadd.s32 %v337, 1
        %v346 = vadd.s32 %v338, 1
        %vm347 = vcmp.eq.s32.totalorder %v336, %v345
        %vm348 = vcmp.eq.s32.totalorder %v336, %v346
        %v349 = vsel %vm347, 1, 0
        %v350 = vsel %vm348, 1, 0
        %v351 = vcvt.s32.f32 %v349
        %v352 = vcvt.s32.f32 %v350
        %v353 = vadd.s32 %v333, 16
        %v354 = vadd.s32 %v333, 24
        %v355 = vmul.u32 %v336, 2
        %vm356 = vcmp.eq.s32.totalorder %v333, %v355
        %vm357 = vcmp.eq.s32.totalorder %v334, %v355
        %vm358 = vcmp.eq.s32.totalorder %v353, %v355
        %vm359 = vcmp.eq.s32.totalorder %v354, %v355
        %v360 = vsel %vm356, 1, 0
        %v361 = vsel %vm357, 1, 0
        %v362 = vsel %vm358, 1, 0
        %v363 = vsel %vm359, 1, 0
        %v364 = vcvt.s32.f32 %v360
        %v365 = vcvt.s32.f32 %v361
        %v366 = vcvt.s32.f32 %v362
        %v367 = vcvt.s32.f32 %v363
        %v368 = vadd.s32 %v355, 1
        %vm369 = vcmp.eq.s32.totalorder %v333, %v368
        %vm370 = vcmp.eq.s32.totalorder %v334, %v368
        %vm371 = vcmp.eq.s32.totalorder %v353, %v368
        %vm372 = vcmp.eq.s32.totalorder %v354, %v368
        %v373 = vsel %vm369, 1, 0
        %v374 = vsel %vm370, 1, 0
        %v375 = vsel %vm371, 1, 0
        %v376 = vsel %vm372, 1, 0
        %v377 = vcvt.s32.f32 %v373
        %v378 = vcvt.s32.f32 %v374
        %v379 = vcvt.s32.f32 %v375
        %v380 = vcvt.s32.f32 %v376
        %s381 = sld [smem:[#allocation6]]
        %v382 = vstv %s381
        %v383 = vmul.f32 %v324, %v382
        %v384 = vmul.f32 %v325, %v382
        %s385 = sld [smem:[#allocation6 + $0x1]]
        %v386 = vstv %s385
        %v387 = vmul.f32 %v326, %v386
        %v388 = vmul.f32 %v327, %v386
        %v389 = vadd.f32 %v383, %v387
        %v390 = vadd.f32 %v384, %v388
        %s391 = sld [smem:[#allocation6 + $0x2]]
        %v392 = vstv %s391
        %v393 = vmul.f32 %v328, %v392
        %v394 = vmul.f32 %v329, %v392
        %v395 = vadd.f32 %v389, %v393
        %v396 = vadd.f32 %v390, %v394
        %s397 = sld [smem:[#allocation6 + $0x3]]
        %v398 = vstv %s397
        %v399 = vmul.f32 %v330, %v398
        %v400 = vmul.f32 %v331, %v398
        %v401 = vadd.f32 %v395, %v399
        %v402 = vadd.f32 %v396, %v400
        %s403 = sld [smem:[#allocation7]]
        %v404 = vstv %s403
        %v405 = vadd.f32 %v401, %v404
        %v406 = vadd.f32 %v402, %v404
        %s407 = sld [smem:[#allocation6 + $0x100]]
        %v408 = vstv %s407
        %v409 = vmul.f32 %v324, %v408
        %v410 = vmul.f32 %v325, %v408
        %s411 = sld [smem:[#allocation6 + $0x101]]
        %v412 = vstv %s411
        %v413 = vmul.f32 %v326, %v412
        %v414 = vmul.f32 %v327, %v412
        %v415 = vadd.f32 %v409, %v413
        %v416 = vadd.f32 %v410, %v414
        %s417 = sld [smem:[#allocation6 + $0x102]]
        %v418 = vstv %s417
        %v419 = vmul.f32 %v328, %v418
        %v420 = vmul.f32 %v329, %v418
        %v421 = vadd.f32 %v415, %v419
        %v422 = vadd.f32 %v416, %v420
        %s423 = sld [smem:[#allocation6 + $0x103]]
        %v424 = vstv %s423
        %v425 = vmul.f32 %v330, %v424
        %v426 = vmul.f32 %v331, %v424
        %v427 = vadd.f32 %v421, %v425
        %v428 = vadd.f32 %v422, %v426
        %s429 = sld [smem:[#allocation7 + $0x2]]
        %v430 = vstv %s429
        %v431 = vadd.f32 %v427, %v430
        %v432 = vadd.f32 %v428, %v430
        %v434 = vsel %vm246, %v431, 0
        %v437 = vsel %vm246, %v432, 0
        %439 = vmatpush.msra.mxu0 0.0
        %440 = vmatpush.msra.mxu0 0.0
        %441 = vmatpush.msra.mxu0 0.0
        %442 = vmatpush.msra.mxu0 0.0
        %443 = vmatpush.msra.mxu0 0.0
        %444 = vmatpush.msra.mxu0 0.0
        %445 = vmatpush.msra.mxu0 0.0
        %446 = vmatpush.msra.mxu0 0.0
        %447 = vmatpush.msra.mxu0 0.0
        %448 = vmatpush.msra.mxu0 0.0
        %449 = vmatpush.msra.mxu0 0.0
        %450 = vmatpush.msra.mxu0 0.0
        %451 = vmatpush.msra.mxu0 0.0
        %452 = vmatpush.msra.mxu0 0.0
        %453 = vmatpush.msra.mxu0 %v352
        %454 = vmatpush.msra.mxu0 %v351
        %455 = vmatmul.f32.gmra.mxu0 %v434
        %v456 = vpop.f32.mrf.mxu0
        %v457 = vadd.f32 0.0, %v456
        %458 = vmatmul.f32.gmra.mxu0 %v437
        %v459 = vpop.f32.mrf.mxu0
        %v460 = vadd.f32 0.0, %v459
        %461 = vdwg.mxu0
        %v463 = vsel %vm246, %v405, 0
        %v466 = vsel %vm246, %v406, 0
        %468 = vmatpush.msra.mxu0 0.0
        %469 = vmatpush.msra.mxu0 0.0
        %470 = vmatpush.msra.mxu0 0.0
        %471 = vmatpush.msra.mxu0 0.0
        %472 = vmatpush.msra.mxu0 0.0
        %473 = vmatpush.msra.mxu0 0.0
        %474 = vmatpush.msra.mxu0 0.0
        %475 = vmatpush.msra.mxu0 0.0
        %476 = vmatpush.msra.mxu0 0.0
        %477 = vmatpush.msra.mxu0 0.0
        %478 = vmatpush.msra.mxu0 0.0
        %479 = vmatpush.msra.mxu0 0.0
        %480 = vmatpush.msra.mxu0 0.0
        %481 = vmatpush.msra.mxu0 0.0
        %482 = vmatpush.msra.mxu0 %v344
        %483 = vmatpush.msra.mxu0 %v343
        %484 = vmatmul.f32.gmra.mxu0 %v463
        %v485 = vpop.f32.mrf.mxu0
        %v486 = vadd.f32 %v457, %v485
        %487 = vmatmul.f32.gmra.mxu0 %v466
        %v488 = vpop.f32.mrf.mxu0
        %v489 = vadd.f32 %v460, %v488
        %490 = vdwg.mxu0
        %s491 = sld [smem:[#allocation6 + $0x200]]
        %v492 = vstv %s491
        %v493 = vmul.f32 %v324, %v492
        %v494 = vmul.f32 %v325, %v492
        %s495 = sld [smem:[#allocation6 + $0x201]]
        %v496 = vstv %s495
        %v497 = vmul.f32 %v326, %v496
        %v498 = vmul.f32 %v327, %v496
        %v499 = vadd.f32 %v493, %v497
        %v500 = vadd.f32 %v494, %v498
        %s501 = sld [smem:[#allocation6 + $0x202]]
        %v502 = vstv %s501
        %v503 = vmul.f32 %v328, %v502
        %v504 = vmul.f32 %v329, %v502
        %v505 = vadd.f32 %v499, %v503
        %v506 = vadd.f32 %v500, %v504
        %s507 = sld [smem:[#allocation6 + $0x203]]
        %v508 = vstv %s507
        %v509 = vmul.f32 %v330, %v508
        %v510 = vmul.f32 %v331, %v508
        %v511 = vadd.f32 %v505, %v509
        %v512 = vadd.f32 %v506, %v510
        %s513 = sld [smem:[#allocation7 + $0x4]]
        %v514 = vstv %s513
        %v515 = vadd.f32 %v511, %v514
        %v516 = vadd.f32 %v512, %v514
        %s517 = sld [smem:[#allocation6 + $0x300]]
        %v518 = vstv %s517
        %v519 = vmul.f32 %v324, %v518
        %v520 = vmul.f32 %v325, %v518
        %s521 = sld [smem:[#allocation6 + $0x301]]
        %v522 = vstv %s521
        %v523 = vmul.f32 %v326, %v522
        %v524 = vmul.f32 %v327, %v522
        %v525 = vadd.f32 %v519, %v523
        %v526 = vadd.f32 %v520, %v524
        %s527 = sld [smem:[#allocation6 + $0x302]]
        %v528 = vstv %s527
        %v529 = vmul.f32 %v328, %v528
        %v530 = vmul.f32 %v329, %v528
        %v531 = vadd.f32 %v525, %v529
        %v532 = vadd.f32 %v526, %v530
        %s533 = sld [smem:[#allocation6 + $0x303]]
        %v534 = vstv %s533
        %v535 = vmul.f32 %v330, %v534
        %v536 = vmul.f32 %v331, %v534
        %v537 = vadd.f32 %v531, %v535
        %v538 = vadd.f32 %v532, %v536
        %s539 = sld [smem:[#allocation7 + $0x6]]
        %v540 = vstv %s539
        %v541 = vadd.f32 %v537, %v540
        %v542 = vadd.f32 %v538, %v540
        %v544 = vsel %vm246, %v541, 0
        %v547 = vsel %vm246, %v542, 0
        %549 = vmatpush.msra.mxu0 0.0
        %550 = vmatpush.msra.mxu0 0.0
        %551 = vmatpush.msra.mxu0 0.0
        %552 = vmatpush.msra.mxu0 0.0
        %553 = vmatpush.msra.mxu0 0.0
        %554 = vmatpush.msra.mxu0 0.0
        %555 = vmatpush.msra.mxu0 0.0
        %556 = vmatpush.msra.mxu0 0.0
        %557 = vmatpush.msra.mxu0 0.0
        %558 = vmatpush.msra.mxu0 0.0
        %559 = vmatpush.msra.mxu0 0.0
        %560 = vmatpush.msra.mxu0 0.0
        %561 = vmatpush.msra.mxu0 0.0
        %562 = vmatpush.msra.mxu0 0.0
        %563 = vmatpush.msra.mxu0 %v352
        %564 = vmatpush.msra.mxu0 %v351
        %565 = vmatmul.f32.gmra.mxu0 %v544
        %v566 = vpop.f32.mrf.mxu0
        %v567 = vadd.f32 0.0, %v566
        %568 = vmatmul.f32.gmra.mxu0 %v547
        %v569 = vpop.f32.mrf.mxu0
        %v570 = vadd.f32 0.0, %v569
        %571 = vdwg.mxu0
        %v573 = vsel %vm246, %v515, 0
        %v576 = vsel %vm246, %v516, 0
        %578 = vmatpush.msra.mxu0 0.0
        %579 = vmatpush.msra.mxu0 0.0
        %580 = vmatpush.msra.mxu0 0.0
        %581 = vmatpush.msra.mxu0 0.0
        %582 = vmatpush.msra.mxu0 0.0
        %583 = vmatpush.msra.mxu0 0.0
        %584 = vmatpush.msra.mxu0 0.0
        %585 = vmatpush.msra.mxu0 0.0
        %586 = vmatpush.msra.mxu0 0.0
        %587 = vmatpush.msra.mxu0 0.0
        %588 = vmatpush.msra.mxu0 0.0
        %589 = vmatpush.msra.mxu0 0.0
        %590 = vmatpush.msra.mxu0 0.0
        %591 = vmatpush.msra.mxu0 0.0
        %592 = vmatpush.msra.mxu0 %v344
        %593 = vmatpush.msra.mxu0 %v343
        %594 = vmatmul.f32.gmra.mxu0 %v573
        %v595 = vpop.f32.mrf.mxu0
        %v596 = vadd.f32 %v567, %v595
        %597 = vmatmul.f32.gmra.mxu0 %v576
        %v598 = vpop.f32.mrf.mxu0
        %v599 = vadd.f32 %v570, %v598
        %600 = vdwg.mxu0
        %v602 = vsel %vm246, %v377, 0
        %v605 = vsel %vm246, %v378, 0
        %v608 = vsel %vm246, %v379, 0
        %v611 = vsel %vm246, %v380, 0
        %613 = vmatpush.msra.mxu0 0.0
        %614 = vmatpush.msra.mxu0 0.0
        %615 = vmatpush.msra.mxu0 0.0
        %616 = vmatpush.msra.mxu0 0.0
        %617 = vmatpush.msra.mxu0 0.0
        %618 = vmatpush.msra.mxu0 0.0
        %619 = vmatpush.msra.mxu0 0.0
        %620 = vmatpush.msra.mxu0 0.0
        %621 = vmatpush.msra.mxu0 0.0
        %622 = vmatpush.msra.mxu0 0.0
        %623 = vmatpush.msra.mxu0 0.0
        %624 = vmatpush.msra.mxu0 0.0
        %625 = vmatpush.msra.mxu0 0.0
        %626 = vmatpush.msra.mxu0 0.0
        %627 = vmatpush.msra.mxu0 %v599
        %628 = vmatpush.msra.mxu0 %v596
        %629 = vmatmul.f32.gmra.mxu0 %v602
        %v630 = vpop.f32.mrf.mxu0
        %v631 = vadd.f32 0.0, %v630
        %632 = vmatmul.f32.gmra.mxu0 %v605
        %v633 = vpop.f32.mrf.mxu0
        %v634 = vadd.f32 0.0, %v633
        %635 = vmatmul.f32.gmra.mxu0 %v608
        %v636 = vpop.f32.mrf.mxu0
        %v637 = vadd.f32 0.0, %v636
        %638 = vmatmul.f32.gmra.mxu0 %v611
        %v639 = vpop.f32.mrf.mxu0
        %v640 = vadd.f32 0.0, %v639
        %641 = vdwg.mxu0
        %v643 = vsel %vm246, %v364, 0
        %v646 = vsel %vm246, %v365, 0
        %v649 = vsel %vm246, %v366, 0
        %v652 = vsel %vm246, %v367, 0
        %654 = vmatpush.msra.mxu0 0.0
        %655 = vmatpush.msra.mxu0 0.0
        %656 = vmatpush.msra.mxu0 0.0
        %657 = vmatpush.msra.mxu0 0.0
        %658 = vmatpush.msra.mxu0 0.0
        %659 = vmatpush.msra.mxu0 0.0
        %660 = vmatpush.msra.mxu0 0.0
        %661 = vmatpush.msra.mxu0 0.0
        %662 = vmatpush.msra.mxu0 0.0
        %663 = vmatpush.msra.mxu0 0.0
        %664 = vmatpush.msra.mxu0 0.0
        %665 = vmatpush.msra.mxu0 0.0
        %666 = vmatpush.msra.mxu0 0.0
        %667 = vmatpush.msra.mxu0 0.0
        %668 = vmatpush.msra.mxu0 %v489
        %669 = vmatpush.msra.mxu0 %v486
        %670 = vmatmul.f32.gmra.mxu0 %v643
        %v671 = vpop.f32.mrf.mxu0
        %v672 = vadd.f32 %v631, %v671
        %673 = vmatmul.f32.gmra.mxu0 %v646
        %v674 = vpop.f32.mrf.mxu0
        %v675 = vadd.f32 %v634, %v674
        %676 = vmatmul.f32.gmra.mxu0 %v649
        %v677 = vpop.f32.mrf.mxu0
        %v678 = vadd.f32 %v637, %v677
        %679 = vmatmul.f32.gmra.mxu0 %v652
        %v680 = vpop.f32.mrf.mxu0
        %v681 = vadd.f32 %v640, %v680
        %682 = vdwg.mxu0
        %vm683 = vcmask 261120
        %684 = vst.msk [vmem:[%s235] sm:$0xff] %vm683, %v672
        %685 = vst.msk [vmem:[%s235 + $0x8] sm:$0xff] %vm683, %v675
        %686 = vst.msk [vmem:[%s235 + $0x10] sm:$0xff] %vm683, %v678
        %687 = vst.msk [vmem:[%s235 + $0x18] sm:$0xff] %vm683, %v681
        %s688 = sld [smem:[#allocation6 + $0x80]]
        %v689 = vstv %s688
        %v690 = vmul.f32 %v324, %v689
        %v691 = vmul.f32 %v325, %v689
        %s692 = sld [smem:[#allocation6 + $0x81]]
        %v693 = vstv %s692
        %v694 = vmul.f32 %v326, %v693
        %v695 = vmul.f32 %v327, %v693
        %v696 = vadd.f32 %v690, %v694
        %v697 = vadd.f32 %v691, %v695
        %s698 = sld [smem:[#allocation6 + $0x82]]
        %v699 = vstv %s698
        %v700 = vmul.f32 %v328, %v699
        %v701 = vmul.f32 %v329, %v699
        %v702 = vadd.f32 %v696, %v700
        %v703 = vadd.f32 %v697, %v701
        %s704 = sld [smem:[#allocation6 + $0x83]]
        %v705 = vstv %s704
        %v706 = vmul.f32 %v330, %v705
        %v707 = vmul.f32 %v331, %v705
        %v708 = vadd.f32 %v702, %v706
        %v709 = vadd.f32 %v703, %v707
        %s710 = sld [smem:[#allocation7 + $0x1]]
        %v711 = vstv %s710
        %v712 = vadd.f32 %v708, %v711
        %v713 = vadd.f32 %v709, %v711
        %s714 = sld [smem:[#allocation6 + $0x180]]
        %v715 = vstv %s714
        %v716 = vmul.f32 %v324, %v715
        %v717 = vmul.f32 %v325, %v715
        %s718 = sld [smem:[#allocation6 + $0x181]]
        %v719 = vstv %s718
        %v720 = vmul.f32 %v326, %v719
        %v721 = vmul.f32 %v327, %v719
        %v722 = vadd.f32 %v716, %v720
        %v723 = vadd.f32 %v717, %v721
        %s724 = sld [smem:[#allocation6 + $0x182]]
        %v725 = vstv %s724
        %v726 = vmul.f32 %v328, %v725
        %v727 = vmul.f32 %v329, %v725
        %v728 = vadd.f32 %v722, %v726
        %v729 = vadd.f32 %v723, %v727
        %s730 = sld [smem:[#allocation6 + $0x183]]
        %v731 = vstv %s730
        %v732 = vmul.f32 %v330, %v731
        %v733 = vmul.f32 %v331, %v731
        %v734 = vadd.f32 %v728, %v732
        %v735 = vadd.f32 %v729, %v733
        %s736 = sld [smem:[#allocation7 + $0x3]]
        %v737 = vstv %s736
        %v738 = vadd.f32 %v734, %v737
        %v739 = vadd.f32 %v735, %v737
        %v741 = vsel %vm246, %v738, 0
        %v744 = vsel %vm246, %v739, 0
        %746 = vmatpush.msra.mxu0 0.0
        %747 = vmatpush.msra.mxu0 0.0
        %748 = vmatpush.msra.mxu0 0.0
        %749 = vmatpush.msra.mxu0 0.0
        %750 = vmatpush.msra.mxu0 0.0
        %751 = vmatpush.msra.mxu0 0.0
        %752 = vmatpush.msra.mxu0 0.0
        %753 = vmatpush.msra.mxu0 0.0
        %754 = vmatpush.msra.mxu0 0.0
        %755 = vmatpush.msra.mxu0 0.0
        %756 = vmatpush.msra.mxu0 0.0
        %757 = vmatpush.msra.mxu0 0.0
        %758 = vmatpush.msra.mxu0 0.0
        %759 = vmatpush.msra.mxu0 0.0
        %760 = vmatpush.msra.mxu0 %v352
        %761 = vmatpush.msra.mxu0 %v351
        %762 = vmatmul.f32.gmra.mxu0 %v741
        %v763 = vpop.f32.mrf.mxu0
        %v764 = vadd.f32 0.0, %v763
        %765 = vmatmul.f32.gmra.mxu0 %v744
        %v766 = vpop.f32.mrf.mxu0
        %v767 = vadd.f32 0.0, %v766
        %768 = vdwg.mxu0
        %v770 = vsel %vm246, %v712, 0
        %v773 = vsel %vm246, %v713, 0
        %775 = vmatpush.msra.mxu0 0.0
        %776 = vmatpush.msra.mxu0 0.0
        %777 = vmatpush.msra.mxu0 0.0
        %778 = vmatpush.msra.mxu0 0.0
        %779 = vmatpush.msra.mxu0 0.0
        %780 = vmatpush.msra.mxu0 0.0
        %781 = vmatpush.msra.mxu0 0.0
        %782 = vmatpush.msra.mxu0 0.0
        %783 = vmatpush.msra.mxu0 0.0
        %784 = vmatpush.msra.mxu0 0.0
        %785 = vmatpush.msra.mxu0 0.0
        %786 = vmatpush.msra.mxu0 0.0
        %787 = vmatpush.msra.mxu0 0.0
        %788 = vmatpush.msra.mxu0 0.0
        %789 = vmatpush.msra.mxu0 %v344
        %790 = vmatpush.msra.mxu0 %v343
        %791 = vmatmul.f32.gmra.mxu0 %v770
        %v792 = vpop.f32.mrf.mxu0
        %v793 = vadd.f32 %v764, %v792
        %794 = vmatmul.f32.gmra.mxu0 %v773
        %v795 = vpop.f32.mrf.mxu0
        %v796 = vadd.f32 %v767, %v795
        %797 = vdwg.mxu0
        %s798 = sld [smem:[#allocation6 + $0x280]]
        %v799 = vstv %s798
        %v800 = vmul.f32 %v324, %v799
        %v801 = vmul.f32 %v325, %v799
        %s802 = sld [smem:[#allocation6 + $0x281]]
        %v803 = vstv %s802
        %v804 = vmul.f32 %v326, %v803
        %v805 = vmul.f32 %v327, %v803
        %v806 = vadd.f32 %v800, %v804
        %v807 = vadd.f32 %v801, %v805
        %s808 = sld [smem:[#allocation6 + $0x282]]
        %v809 = vstv %s808
        %v810 = vmul.f32 %v328, %v809
        %v811 = vmul.f32 %v329, %v809
        %v812 = vadd.f32 %v806, %v810
        %v813 = vadd.f32 %v807, %v811
        %s814 = sld [smem:[#allocation6 + $0x283]]
        %v815 = vstv %s814
        %v816 = vmul.f32 %v330, %v815
        %v817 = vmul.f32 %v331, %v815
        %v818 = vadd.f32 %v812, %v816
        %v819 = vadd.f32 %v813, %v817
        %s820 = sld [smem:[#allocation7 + $0x5]]
        %v821 = vstv %s820
        %v822 = vadd.f32 %v818, %v821
        %v823 = vadd.f32 %v819, %v821
        %s824 = sld [smem:[#allocation6 + $0x380]]
        %v825 = vstv %s824
        %v826 = vmul.f32 %v324, %v825
        %v827 = vmul.f32 %v325, %v825
        %s828 = sld [smem:[#allocation6 + $0x381]]
        %v829 = vstv %s828
        %v830 = vmul.f32 %v326, %v829
        %v831 = vmul.f32 %v327, %v829
        %v832 = vadd.f32 %v826, %v830
        %v833 = vadd.f32 %v827, %v831
        %s834 = sld [smem:[#allocation6 + $0x382]]
        %v835 = vstv %s834
        %v836 = vmul.f32 %v328, %v835
        %v837 = vmul.f32 %v329, %v835
        %v838 = vadd.f32 %v832, %v836
        %v839 = vadd.f32 %v833, %v837
        %s840 = sld [smem:[#allocation6 + $0x383]]
        %v841 = vstv %s840
        %v842 = vmul.f32 %v330, %v841
        %v843 = vmul.f32 %v331, %v841
        %v844 = vadd.f32 %v838, %v842
        %v845 = vadd.f32 %v839, %v843
        %s846 = sld [smem:[#allocation7 + $0x7]]
        %v847 = vstv %s846
        %v848 = vadd.f32 %v844, %v847
        %v849 = vadd.f32 %v845, %v847
        %v851 = vsel %vm246, %v848, 0
        %v854 = vsel %vm246, %v849, 0
        %856 = vmatpush.msra.mxu0 0.0
        %857 = vmatpush.msra.mxu0 0.0
        %858 = vmatpush.msra.mxu0 0.0
        %859 = vmatpush.msra.mxu0 0.0
        %860 = vmatpush.msra.mxu0 0.0
        %861 = vmatpush.msra.mxu0 0.0
        %862 = vmatpush.msra.mxu0 0.0
        %863 = vmatpush.msra.mxu0 0.0
        %864 = vmatpush.msra.mxu0 0.0
        %865 = vmatpush.msra.mxu0 0.0
        %866 = vmatpush.msra.mxu0 0.0
        %867 = vmatpush.msra.mxu0 0.0
        %868 = vmatpush.msra.mxu0 0.0
        %869 = vmatpush.msra.mxu0 0.0
        %870 = vmatpush.msra.mxu0 %v352
        %871 = vmatpush.msra.mxu0 %v351
        %872 = vmatmul.f32.gmra.mxu0 %v851
        %v873 = vpop.f32.mrf.mxu0
        %v874 = vadd.f32 0.0, %v873
        %875 = vmatmul.f32.gmra.mxu0 %v854
        %v876 = vpop.f32.mrf.mxu0
        %v877 = vadd.f32 0.0, %v876
        %878 = vdwg.mxu0
        %v880 = vsel %vm246, %v822, 0
        %v883 = vsel %vm246, %v823, 0
        %885 = vmatpush.msra.mxu0 0.0
        %886 = vmatpush.msra.mxu0 0.0
        %887 = vmatpush.msra.mxu0 0.0
        %888 = vmatpush.msra.mxu0 0.0
        %889 = vmatpush.msra.mxu0 0.0
        %890 = vmatpush.msra.mxu0 0.0
        %891 = vmatpush.msra.mxu0 0.0
        %892 = vmatpush.msra.mxu0 0.0
        %893 = vmatpush.msra.mxu0 0.0
        %894 = vmatpush.msra.mxu0 0.0
        %895 = vmatpush.msra.mxu0 0.0
        %896 = vmatpush.msra.mxu0 0.0
        %897 = vmatpush.msra.mxu0 0.0
        %898 = vmatpush.msra.mxu0 0.0
        %899 = vmatpush.msra.mxu0 %v344
        %900 = vmatpush.msra.mxu0 %v343
        %901 = vmatmul.f32.gmra.mxu0 %v880
        %v902 = vpop.f32.mrf.mxu0
        %v903 = vadd.f32 %v874, %v902
        %904 = vmatmul.f32.gmra.mxu0 %v883
        %v905 = vpop.f32.mrf.mxu0
        %v906 = vadd.f32 %v877, %v905
        %907 = vdwg.mxu0
        %908 = vmatpush.msra.mxu0 0.0
        %909 = vmatpush.msra.mxu0 0.0
        %910 = vmatpush.msra.mxu0 0.0
        %911 = vmatpush.msra.mxu0 0.0
        %912 = vmatpush.msra.mxu0 0.0
        %913 = vmatpush.msra.mxu0 0.0
        %914 = vmatpush.msra.mxu0 0.0
        %915 = vmatpush.msra.mxu0 0.0
        %916 = vmatpush.msra.mxu0 0.0
        %917 = vmatpush.msra.mxu0 0.0
        %918 = vmatpush.msra.mxu0 0.0
        %919 = vmatpush.msra.mxu0 0.0
        %920 = vmatpush.msra.mxu0 0.0
        %921 = vmatpush.msra.mxu0 0.0
        %922 = vmatpush.msra.mxu0 %v906
        %923 = vmatpush.msra.mxu0 %v903
        %924 = vmatmul.f32.gmra.mxu0 %v602
        %v925 = vpop.f32.mrf.mxu0
        %v926 = vadd.f32 0.0, %v925
        %927 = vmatmul.f32.gmra.mxu0 %v605
        %v928 = vpop.f32.mrf.mxu0
        %v929 = vadd.f32 0.0, %v928
        %930 = vmatmul.f32.gmra.mxu0 %v608
        %v931 = vpop.f32.mrf.mxu0
        %v932 = vadd.f32 0.0, %v931
        %933 = vmatmul.f32.gmra.mxu0 %v611
        %v934 = vpop.f32.mrf.mxu0
        %v935 = vadd.f32 0.0, %v934
        %936 = vdwg.mxu0
        %937 = vmatpush.msra.mxu0 0.0
        %938 = vmatpush.msra.mxu0 0.0
        %939 = vmatpush.msra.mxu0 0.0
        %940 = vmatpush.msra.mxu0 0.0
        %941 = vmatpush.msra.mxu0 0.0
        %942 = vmatpush.msra.mxu0 0.0
        %943 = vmatpush.msra.mxu0 0.0
        %944 = vmatpush.msra.mxu0 0.0
        %945 = vmatpush.msra.mxu0 0.0
        %946 = vmatpush.msra.mxu0 0.0
        %947 = vmatpush.msra.mxu0 0.0
        %948 = vmatpush.msra.mxu0 0.0
        %949 = vmatpush.msra.mxu0 0.0
        %950 = vmatpush.msra.mxu0 0.0
        %951 = vmatpush.msra.mxu0 %v796
        %952 = vmatpush.msra.mxu0 %v793
        %953 = vmatmul.f32.gmra.mxu0 %v643
        %v954 = vpop.f32.mrf.mxu0
        %v955 = vadd.f32 %v926, %v954
        %956 = vmatmul.f32.gmra.mxu0 %v646
        %v957 = vpop.f32.mrf.mxu0
        %v958 = vadd.f32 %v929, %v957
        %959 = vmatmul.f32.gmra.mxu0 %v649
        %v960 = vpop.f32.mrf.mxu0
        %v961 = vadd.f32 %v932, %v960
        %962 = vmatmul.f32.gmra.mxu0 %v652
        %v963 = vpop.f32.mrf.mxu0
        %v964 = vadd.f32 %v935, %v963
        %965 = vdwg.mxu0
        %s966 = scalar_lea.vmem %s235, 32 [#allocation9]
        %967 = vst.msk [vmem:[%s966] sm:$0xff] %vm683, %v955
        %968 = vst.msk [vmem:[%s966 + $0x8] sm:$0xff] %vm683, %v958
        %969 = vst.msk [vmem:[%s966 + $0x10] sm:$0xff] %vm683, %v961
        %970 = vst.msk [vmem:[%s966 + $0x18] sm:$0xff] %vm683, %v964
        %s971 = sand.u32 %s114, 1
        %s972 = scalar_lea.sflag [#allocation4], %s971
        %s973 = sand.u32 %s114, 1
        %s974 = smul.addr %s973, 64
        %s975 = scalar_lea.vmem [#allocation9], %s974
        // Predicated region
        $region45: #{tpu_custom_call.1} parent=31 // pred_check
          %p976 = pneg %p124
        $region46: #{tpu_custom_call.1} parent=31 // pred_check_branch
          %978 = sbr.rel (%p976) target = $region48
        $region47: #{tpu_custom_call.1} parent=31 // pred_region
          %s979 = smul.u32 4, %s27
          %981 = vsyncadd %s972, 0
          %s982 = smul.addr %s26, 8
          %s983 = sadd.s32 %s979, %s982
          %s984 = smul.addr %s983, 8
          %s985 = scalar_lea.hbm %s3, %s984
          %s986 = sshll.u32 %s975, 4
          %s987 = int_to_ptr.vmem [resolvable:$true] %s986
          %s988 = sshll.u32 %s985, 4
          %s989 = int_to_ptr.hbm [resolvable:$true] %s988
          %994 = dma.vmem_to_hbm [thread:$0]  %s987, 1024, %s989, %s972, 128, 128, 8
        $region48: #{tpu_custom_call.1} parent=31 // pred_fallthru
          _
      $region32: #{tpu_custom_call.1} parent=5 // pred_fallthru
        _
      %p995 = scmp.le.s32.totalorder 2, %s17
      // Predicated region
      $region49: #{tpu_custom_call.1} parent=5 // pred_check
        %p996 = pneg %p995
      $region50: #{tpu_custom_call.1} parent=5 // pred_check_branch
        %998 = sbr.rel (%p996) target = $region52
      $region51: #{tpu_custom_call.1} parent=5 // pred_region
        %s999 = ssub.s32 %s17, 2
        // Predicated region
        $region53: #{tpu_custom_call.1} parent=51 // pred_check
          %p1000 = pneg %p130
        $region54: #{tpu_custom_call.1} parent=51 // pred_check_branch
          %1002 = sbr.rel (%p1000) target = $region56
        $region55: #{tpu_custom_call.1} parent=51 // pred_region
          %s1003 = sand.u32 %s115, 1
          %s1004 = scalar_lea.sflag [#allocation4], %s1003
          %s1005 = sand.u32 %s115, 1
          %s1006 = smul.addr %s1005, 64
          %s1007 = scalar_lea.vmem [#allocation9], %s1006
          %1009 = dma.done %s1004, 1024
        $region56: #{tpu_custom_call.1} parent=51 // pred_fallthru
          _
      $region52: #{tpu_custom_call.1} parent=5 // pred_fallthru
        _
    $region6: #{tpu_custom_call.1} parent=1 // loop_footer
      %s21 = sadd.s32 1, %s17
    $region7: #{tpu_custom_call.1} parent=1 // loop_footer_branch
      %16 = sbr.rel target = $region3
    $region8: #{tpu_custom_call.1} parent=1 // loop_exit
      _
    %1010 = vsyncpa [#allocation3], 1
    %s1011 = scalar_lea.sflag [#allocation3], 1
    %1012 = vsyncpa %s1011, 1
    %1013 = vsyncpa [#allocation4], 1
    %s1014 = scalar_lea.sflag [#allocation4], 1
    %1015 = vsyncpa %s1014, 1
    %1016 = vsyncpa [#allocation5], 1
    %s1017 = scalar_lea.sflag [#allocation5], 1
    %1018 = vsyncpa %s1017, 1
    %1019 = vsyncpa [#allocation8], 1

</llo_original>
